<compile_context>
chip_gen: v7x
topology: tpu7x:2x2x1
jax: 0.10.0
libtpu: 0.0.40
codegen_flags: <defaults>
</compile_context>

<pallas_src>
import jax
import jax.numpy as jnp
from jax.experimental import pallas as pl
from jax.experimental.pallas import tpu as pltpu


def _round_up(x, m):
    return ((x + m - 1) // m) * m


def _matmul_kernel(x_ref, w_ref, o_ref):
    # x_ref: (tm, C_in)    rows of the flattened activations (N*L folded into M)
    # w_ref: (C_in, C_out) pre-transposed weight (resident; same block every step)
    # o_ref: (tm, C_out)   output rows
    o_ref[...] = jnp.dot(
        x_ref[...], w_ref[...], preferred_element_type=jnp.float32
    ).astype(o_ref.dtype)


def permute_matmul(x1, x2, *, tm_max=256):
    """x1: (C_out, 1, C_in), x2: (N, L, C_in) -> (N, C_out, L) float32.

    out[n, o, l] = sum_c x1[o, 0, c] * x2[n, l, c]
    """
    c_out, one, c_in = x1.shape
    assert one == 1, "middle dim of x1 must be 1 (it gets squeezed)"
    n, l, c_in2 = x2.shape
    assert c_in == c_in2

    # Weight: permute(0,2,1).squeeze(-1) == x1[:, 0, :]; pre-transpose once so the
    # kernel matmul is MXU-friendly (K on LHS last dim / RHS first dim).
    w_t = jnp.transpose(x1[:, 0, :])          # (C_in, C_out), tiny, done once in XLA

    # Fold batch + length into the matmul M dimension.
    m = n * l
    x = x2.reshape(m, c_in)                   # (M, C_in)

    # Row tile: multiple of 8, capped at tm_max; pad M so the grid divides evenly.
    tm = tm_max if m >= tm_max else _round_up(m, 8)
    m_pad = _round_up(m, tm)
    if m_pad != m:
        x = jnp.pad(x, ((0, m_pad - m), (0, 0)))

    grid = (m_pad // tm,)
    itemsize = jnp.dtype(x.dtype).itemsize
    flops = 2 * m_pad * c_in * c_out
    bytes_accessed = (m_pad * c_in + c_in * c_out) * itemsize + m_pad * c_out * 4

    out_flat = pl.pallas_call(
        _matmul_kernel,
        out_shape=jax.ShapeDtypeStruct((m_pad, c_out), jnp.float32),
        grid_spec=pltpu.PrefetchScalarGridSpec(
            num_scalar_prefetch=0,
            grid=grid,
            in_specs=[
                # Activation rows: one M-tile per grid step.
                pl.BlockSpec((tm, c_in), lambda i: (i, 0)),
                # Weight: same full (C_in, C_out) block every step.
                pl.BlockSpec((c_in, c_out), lambda i: (0, 0)),
            ],
            out_specs=pl.BlockSpec((tm, c_out), lambda i: (i, 0)),
        ),
        compiler_params=pltpu.CompilerParams(
            dimension_semantics=("parallel",),   # M-tiles shard across TCs (v7x)
            vmem_limit_bytes=32 * 1024 * 1024,   # fits v7x's 64 MiB physical VMEM
        ),
        cost_estimate=pl.CostEstimate(
            flops=flops, transcendentals=0, bytes_accessed=bytes_accessed
        ),
    )(x, w_t)

    # Unpad, restore (N, L, C_out), then one XLA transpose to the conv output
    # layout (N, C_out, L).
    out = out_flat[:m].reshape(n, l, c_out)
    return jnp.transpose(out, (0, 2, 1))


if __name__ == "__main__":
    # Small shapes consistent with the forward: weight (C_out, 1, C_in),
    # activations (N, L, C_in).
    N, L, C_IN, C_OUT = 2, 8, 32, 16

    key = jax.random.PRNGKey(0)
    k1, k2 = jax.random.split(key)
    x1 = jax.random.normal(k1, (C_OUT, 1, C_IN), dtype=jnp.float32)
    x2 = jax.random.normal(k2, (N, L, C_IN), dtype=jnp.float32)

    out = jax.block_until_ready(permute_matmul(x1, x2))

    # Pure-JAX reference of the same semantics.
    ref = jnp.einsum("oc,nlc->nol", x1[:, 0, :], x2)
    assert out.shape == (N, C_OUT, L), out.shape
    assert jnp.allclose(out, ref, atol=1e-5, rtol=1e-5), "mismatch vs reference"

    print("KERNEL_OK")
</pallas_src>

<mosaic_0001>
module attributes {stable_mosaic.version = 11 : i64} {
  func.func @_matmul_kernel(%arg0: i32, %arg1: memref<16x32xf32, #tpu.memory_space<vmem>>, %arg2: memref<32x16xf32, #tpu.memory_space<vmem>>, %arg3: memref<16x16xf32, #tpu.memory_space<vmem>>) attributes {dimension_semantics = [#tpu.dimension_semantics<parallel>], iteration_bounds = array<i64: 1>, scalar_prefetch = 0 : i64, scratch_operands = 0 : i64, tpu.core_type = #tpu.core_type<tc>, window_params = [{transform_indices = @transform_0, window_bounds = array<i64: 16, 32>}, {pipeline_mode = #tpu.pipeline_mode<synchronous>, transform_indices = @transform_1, window_bounds = array<i64: 32, 16>}, {transform_indices = @transform_2, window_bounds = array<i64: 16, 16>}]} {
    %c0 = arith.constant 0 : index
    %c0_0 = arith.constant 0 : index
    %0 = vector.load %arg1[%c0, %c0_0] : memref<16x32xf32, #tpu.memory_space<vmem>>, vector<16x32xf32>
    %c0_1 = arith.constant 0 : index
    %c0_2 = arith.constant 0 : index
    %1 = vector.load %arg2[%c0_1, %c0_2] : memref<32x16xf32, #tpu.memory_space<vmem>>, vector<32x16xf32>
    %cst = arith.constant dense<0.000000e+00> : vector<16x16xf32>
    %2 = tpu.matmul %0, %1, %cst {dimension_numbers = #tpu.dot_dimension_numbers<[1], [0], [0], [1], [0, 0, 1, 1], [], []>} : vector<16x32xf32>, vector<32x16xf32>, vector<16x16xf32> -> vector<16x16xf32>
    %c0_3 = arith.constant 0 : index
    %c0_4 = arith.constant 0 : index
    %3 = vector.load %arg3[%c0_3, %c0_4] : memref<16x16xf32, #tpu.memory_space<vmem>>, vector<16x16xf32>
    tpu.vector_store %arg3[%c0_3, %c0_4], %2 {strides = array<i32>} : memref<16x16xf32, #tpu.memory_space<vmem>>, vector<16x16xf32>,
    return
  }
  func.func @transform_0(%arg0: i32) -> (i32, i32) {
    %c0_i32 = arith.constant 0 : i32
    %c0_i32_0 = arith.constant 0 : i32
    return %arg0, %c0_i32 : i32, i32
  }
  func.func @transform_1(%arg0: i32) -> (i32, i32) {
    %c0_i32 = arith.constant 0 : i32
    %c0_i32_0 = arith.constant 0 : i32
    %c0_i32_1 = arith.constant 0 : i32
    return %c0_i32, %c0_i32_0 : i32, i32
  }
  func.func @transform_2(%arg0: i32) -> (i32, i32) {
    %c0_i32 = arith.constant 0 : i32
    %c0_i32_0 = arith.constant 0 : i32
    return %arg0, %c0_i32 : i32, i32
  }
}

</mosaic_0001>

<llo_original>
// kernel: tpu_custom_call.1
$region0: #{tpu_custom_call.1}
  #allocation0 [shape = 'u32[]', space=smem, size = 0x4, offset = 0x4, fixed_abs, tag = 'smem constant byte address 0x4 - core index']
  #allocation1 [shape = 'u32[144,128]{1,0:T(1,128)}', space=vmem, size = 0x12000, scoped, tag = 'internal scratch']
  %s0 = inlined_call_operand.vmem [shape: f32[16,32], index: 0, kind: input, shape index: {}]
  %s1 = inlined_call_operand.vmem [shape: f32[32,16], index: 1, kind: input, shape index: {}]
  %s2 = inlined_call_operand.hbm [shape: f32[16,16], index: 2, kind: output, shape index: {}]
  %s3 = sld [smem:[#allocation0]]
  $region18: #{tpu_custom_call.1} parent=0
    _
  %s5 = ssub.s32 1, %s3
  %s6 = scalar_select 0, %s5, %s3
  $region1: #{tpu_custom_call.1} parent=0
    #allocation2 [shape = 'u8[8192]{0}', space=vmem, size = 0x2000, scoped, tag = 'output window, operand 0, single buffered']
    #allocation3 [shape = 's32[1]{0}', space=sflag, size = 0x4, scoped, tag = 'scoped memory for tpu_custom_call.1']
    %7 = vsyncpa [#allocation3], 0
    // Predicated region
    $region2: #{tpu_custom_call.1} parent=1 // pred_check
      _
    $region3: #{tpu_custom_call.1} parent=1 // pred_check_branch
      %9 = sbr.rel (0) target = $region5
    $region4: #{tpu_custom_call.1} parent=1 // pred_region
      _
    $region5: #{tpu_custom_call.1} parent=1 // pred_fallthru
      _
    // Predicated region
    $region6: #{tpu_custom_call.1} parent=1 // pred_check
      _
    $region7: #{tpu_custom_call.1} parent=1 // pred_check_branch
      %11 = sbr.rel (0) target = $region9
    $region8: #{tpu_custom_call.1} parent=1 // pred_region
      _
    $region9: #{tpu_custom_call.1} parent=1 // pred_fallthru
      _
    %v12 = vld [vmem:[%s0] sm:$0xff]
    %v13 = vld [vmem:[%s0 + $0x8] sm:$0xff]
    %v14 = vld [vmem:[%s1] sm:$0xff]
    %v15 = vld [vmem:[%s1 + $0x8] sm:$0xff]
    %v16 = vld [vmem:[%s1 + $0x10] sm:$0xff]
    %v17 = vld [vmem:[%s1 + $0x18] sm:$0xff]
    %vm18 = vcmask 261120
    %v20 = vsel %vm18, %v12, 0
    %v23 = vsel %vm18, %v13, 0
    %25 = vmatprep.subr.mxu0 0.0
    %26 = vmatpush1.msra.mxu0 %v14
    %27 = vmatprep.subr.mxu0 0.0
    %28 = vmatpush1.msra.mxu0 %v15
    %29 = vmatprep.subr.mxu0 0.0
    %30 = vmatpush1.msra.mxu0 %v16
    %31 = vmatprep.subr.mxu0 0.0
    %32 = vmatpush1.msra.mxu0 %v17
    %33 = vmatprep.subr.mxu0 0.0
    %34 = vmatpush1.msra.mxu0 0.0
    %35 = vmatprep.subr.mxu0 0.0
    %36 = vmatpush1.msra.mxu0 0.0
    %37 = vmatprep.subr.mxu0 0.0
    %38 = vmatpush1.msra.mxu0 0.0
    %39 = vmatprep.subr.mxu0 0.0
    %40 = vmatpush1.msra.mxu0 0.0
    %41 = vmatprep.subr.mxu0 0.0
    %42 = vmatpush1.msra.mxu0 0.0
    %43 = vmatprep.subr.mxu0 0.0
    %44 = vmatpush1.msra.mxu0 0.0
    %45 = vmatprep.subr.mxu0 0.0
    %46 = vmatpush1.msra.mxu0 0.0
    %47 = vmatprep.subr.mxu0 0.0
    %48 = vmatpush1.msra.mxu0 0.0
    %49 = vmatprep.subr.mxu0 0.0
    %50 = vmatpush1.msra.mxu0 0.0
    %51 = vmatprep.subr.mxu0 0.0
    %52 = vmatpush1.msra.mxu0 0.0
    %53 = vmatprep.subr.mxu0 0.0
    %54 = vmatpush1.msra.mxu0 0.0
    %55 = vmatprep.subr.mxu0 0.0
    %56 = vmatpush1.msra.mxu0 0.0
    %57 = vmatprep.subr.mxu0 0.0
    %58 = vmatpush1.msra.mxu0 0.0
    %59 = vmatprep.subr.mxu0 0.0
    %60 = vmatpush1.msra.mxu0 0.0
    %61 = vmatprep.subr.mxu0 0.0
    %62 = vmatpush1.msra.mxu0 0.0
    %63 = vmatprep.subr.mxu0 0.0
    %64 = vmatpush1.msra.mxu0 0.0
    %65 = vmatprep.subr.mxu0 0.0
    %66 = vmatpush1.msra.mxu0 0.0
    %67 = vmatprep.subr.mxu0 0.0
    %68 = vmatpush1.msra.mxu0 0.0
    %69 = vmatprep.subr.mxu0 0.0
    %70 = vmatpush1.msra.mxu0 0.0
    %71 = vmatprep.subr.mxu0 0.0
    %72 = vmatpush1.msra.mxu0 0.0
    %73 = vmatprep.subr.mxu0 0.0
    %74 = vmatpush1.msra.mxu0 0.0
    %75 = vmatprep.subr.mxu0 0.0
    %76 = vmatpush1.msra.mxu0 0.0
    %77 = vmatprep.subr.mxu0 0.0
    %78 = vmatpush1.msra.mxu0 0.0
    %79 = vmatprep.subr.mxu0 0.0
    %80 = vmatpush1.msra.mxu0 0.0
    %81 = vmatprep.subr.mxu0 0.0
    %82 = vmatpush1.msra.mxu0 0.0
    %83 = vmatprep.subr.mxu0 0.0
    %84 = vmatpush1.msra.mxu0 0.0
    %85 = vmatprep.subr.mxu0 0.0
    %86 = vmatpush1.msra.mxu0 0.0
    %87 = vmatprep.subr.mxu0 0.0
    %88 = vmatpush1.msra.mxu0 0.0
    %89 = vmatprep.mubr.f32.mxu0 0.0
    %90 = vmatmul.mubr.f32.gmra.mrb[0].mxu0 %v20
    %v91 = vpop.f32.mrb[0].mxu0
    %v92 = vadd.f32 0.0, %v91
    %v93 = vpop.f32.mrb[0].mxu0
    %94 = vmatprep.mubr.f32.mxu0 0.0
    %95 = vmatmul.mubr.f32.gmra.mrb[0].mxu0 %v23
    %v96 = vpop.f32.mrb[0].mxu0
    %v97 = vadd.f32 0.0, %v96
    %v98 = vpop.f32.mrb[0].mxu0
    %99 = vdwg.mxu0
    %vm100 = vcmask 130048
    %101 = vst.msk [vmem:[#allocation2] sm:$0xff] %vm100, %v92
    %102 = vst.msk [vmem:[#allocation2 + $0x8] sm:$0xff] %vm100, %v97
    // Predicated region
    $region10: #{tpu_custom_call.1} parent=1 // pred_check
      _
    $region11: #{tpu_custom_call.1} parent=1 // pred_check_branch
      %104 = sbr.rel (0) target = $region13
    $region12: #{tpu_custom_call.1} parent=1 // pred_region
      %s106 = ssub.s32 256, 256
      %107 = vsyncadd [#allocation3], %s106
      %s108 = sshll.u32 [#allocation2], 4
      %s109 = int_to_ptr.vmem [resolvable:$true] %s108
      %114 = dma.vmem_to_hbm [thread:$0]  %s109, 256, %s2, [#allocation3], 128, 128, 8
    $region13: #{tpu_custom_call.1} parent=1 // pred_fallthru
      _
    // Predicated region
    $region14: #{tpu_custom_call.1} parent=1 // pred_check
      _
    $region15: #{tpu_custom_call.1} parent=1 // pred_check_branch
      %116 = sbr.rel (0) target = $region17
    $region16: #{tpu_custom_call.1} parent=1 // pred_region
      %117 = dma.done [#allocation3], 256
    $region17: #{tpu_custom_call.1} parent=1 // pred_fallthru
      _
    %118 = vsyncpa [#allocation3], 1

</llo_original>
